<compile_context>
chip_gen: v5e
topology: v5e:2x2
jax: 0.10.0
libtpu: 0.0.40
codegen_flags: <defaults>
</compile_context>

<pallas_src>
import functools

import jax
import jax.numpy as jnp
from jax.experimental import pallas as pl
from jax.experimental.pallas import tpu as pltpu


# ----------------------------------------------------------------------------
# Kernel: per-graph partial sums  s1 = sum(eu/d), s2 = sum((eu/d)^2), cnt = #edges
# ----------------------------------------------------------------------------
def _partials_kernel(slab_ref, s1_ref, s2_ref, cnt_ref, *, d_dim, g_pad):
    """One edge tile.

    slab_ref : [2*d_dim + 2, TILE_E] f32. Rows: start^T (d_dim), end^T (d_dim),
               d, gid.  gid == -1 marks padded edges (matches no graph),
               d == 1 on padded edges so r = 0/1 = 0 (no NaNs).
    s1/s2/cnt_ref : [g_pad, 1] f32 output blocks, resident across the inner
               (reduction) grid axis.
    """
    i = pl.program_id(1)

    @pl.when(i == 0)
    def _init():
        s1_ref[...] = jnp.zeros_like(s1_ref)
        s2_ref[...] = jnp.zeros_like(s2_ref)
        cnt_ref[...] = jnp.zeros_like(cnt_ref)

    slab = slab_ref[...]                                   # [2D+2, TE]
    te = slab.shape[1]

    start = slab[0:d_dim, :]                               # [D, TE]
    end = slab[d_dim:2 * d_dim, :]                         # [D, TE]
    d = slab[2 * d_dim:2 * d_dim + 1, :]                   # [1, TE]
    gid = slab[2 * d_dim + 1:2 * d_dim + 2, :]             # [1, TE]

    diff = start - end
    eu = jnp.sqrt(jnp.sum(diff * diff, axis=0, keepdims=True))   # [1, TE]
    # exact division (not approx reciprocal) to keep full f32 accuracy of r, r^2
    r = eu / d                                             # [1, TE]; padded edges -> 0
    r2 = r * r

    # In-kernel one-hot scatter: graphs on sublanes, edges on lanes.
    gid_i = gid.astype(jnp.int32)
    giota = jax.lax.broadcasted_iota(jnp.int32, (g_pad, te), 0)
    onehot = (giota == gid_i).astype(jnp.float32)          # [g_pad, TE]

    s1_ref[...] += jnp.sum(onehot * r, axis=1, keepdims=True)    # [g_pad, 1]
    s2_ref[...] += jnp.sum(onehot * r2, axis=1, keepdims=True)
    cnt_ref[...] += jnp.sum(onehot, axis=1, keepdims=True)


# ----------------------------------------------------------------------------
# Wrapper (glue: gather, lane-dense packing, closed-form epilogue, mean reduce)
# ----------------------------------------------------------------------------
def scaled_stress_pallas(node_pos, edge_index, d, node_batch, num_graphs,
                         *, tile_e=32768, num_slices=2):
    node_pos = node_pos.astype(jnp.float32)
    d = d.astype(jnp.float32)
    E = edge_index.shape[1]
    D = node_pos.shape[1]
    G = int(num_graphs)

    # data-dependent gathers (stay in plain JAX)
    start = node_pos[edge_index[0]]                        # [E, D]
    end = node_pos[edge_index[1]]                          # [E, D]
    gid = node_batch[edge_index[0]].astype(jnp.float32)    # [E] graph id per edge

    G_pad = max(8, ((G + 7) // 8) * 8)

    # ---- adaptive tile size -------------------------------------------------
    # shrink for small problems (don't DMA megabytes of padding) ...
    ideal = (-(-E // num_slices) + 127) // 128 * 128
    tile_e = max(128, min(tile_e, ideal))
    # ... and cap so the [G_pad, tile_e] one-hot temporary stays ~2 MiB of VMEM.
    max_onehot_cols = max(128, (2 * 1024 * 1024) // (4 * G_pad) // 128 * 128)
    tile_e = min(tile_e, max_onehot_cols)
    assert tile_e % 128 == 0

    # pack one lane-dense slab [2D+2, E_pad]; padded columns: pos=0, d=1, gid=-1
    chunk = num_slices * tile_e
    E_pad = ((E + chunk - 1) // chunk) * chunk
    pad_c = E_pad - E
    rows_used = 2 * D + 2

    slab = jnp.concatenate([
        jnp.pad(start.T, ((0, 0), (0, pad_c))),
        jnp.pad(end.T, ((0, 0), (0, pad_c))),
        jnp.pad(d[None, :], ((0, 0), (0, pad_c)), constant_values=1.0),
        jnp.pad(gid[None, :], ((0, 0), (0, pad_c)), constant_values=-1.0),
    ], axis=0)                                             # [2D+2, E_pad]

    steps = E_pad // chunk                                 # tiles per slice
    grid = (num_slices, steps)                             # ("parallel", "arbitrary")

    kernel = functools.partial(_partials_kernel, d_dim=D, g_pad=G_pad)

    # sublane dim == full array dim (no 8-row padding) -> legal block, less HBM traffic
    slab_spec = pl.BlockSpec((rows_used, tile_e), lambda c, i: (0, c * steps + i))
    acc_spec = pl.BlockSpec((None, G_pad, 1), lambda c, i: (c, 0, 0))
    acc_shape = jax.ShapeDtypeStruct((num_slices, G_pad, 1), jnp.float32)

    s1, s2, cnt = pl.pallas_call(
        kernel,
        out_shape=(acc_shape, acc_shape, acc_shape),
        grid_spec=pltpu.PrefetchScalarGridSpec(
            num_scalar_prefetch=0,
            grid=grid,
            in_specs=[slab_spec],
            out_specs=[acc_spec, acc_spec, acc_spec]),
        compiler_params=pltpu.CompilerParams(
            dimension_semantics=("parallel", "arbitrary")),
    )(slab)

    # tiny per-graph epilogue (G floats): combine per-slice partials, then
    # graph_stress_g = n_g - s1_g^2 / s2_g  (== sum_e ((eu_e/scale_g - d_e)/d_e)^2
    # with scale_g = s2_g / s1_g), and reduce = mean.
    s1 = jnp.sum(s1[:, :G, 0], axis=0)
    s2 = jnp.sum(s2[:, :G, 0], axis=0)
    cnt = jnp.sum(cnt[:, :G, 0], axis=0)
    graph_stress = cnt - (s1 * s1) / s2
    return jnp.mean(graph_stress)


# ----------------------------------------------------------------------------
# Pure-JAX reference (follows the PyTorch two-pass formulation exactly)
# ----------------------------------------------------------------------------
def ref_scaled_stress(node_pos, edge_index, d, node_batch, num_graphs):
    start = node_pos[edge_index[0]]
    end = node_pos[edge_index[1]]
    eu = jnp.linalg.norm(start - end, axis=1)
    index = node_batch[edge_index[0]]
    r = eu / d
    s2 = jax.ops.segment_sum(r ** 2, index, num_segments=num_graphs)
    s1 = jax.ops.segment_sum(r, index, num_segments=num_graphs)
    scale = s2 / s1
    scaled = node_pos / scale[node_batch][:, None]
    start = scaled[edge_index[0]]
    end = scaled[edge_index[1]]
    eu = jnp.linalg.norm(start - end, axis=1)
    stress = jnp.square(jnp.abs(eu - d) / d)
    graph_stress = jax.ops.segment_sum(stress, index, num_segments=num_graphs)
    return jnp.mean(graph_stress)


if __name__ == "__main__":
    key = jax.random.PRNGKey(0)
    G, n_per, D = 3, 8, 2           # 3 graphs, 8 nodes each, 2-D layout positions
    N = G * n_per
    k1, k2 = jax.random.split(key)

    node_pos = jax.random.normal(k1, (N, D), dtype=jnp.float32)
    node_batch = jnp.repeat(jnp.arange(G, dtype=jnp.int32), n_per)

    # full (complete, directed, no self-loop) edge set within each graph
    src, dst = [], []
    for g in range(G):
        base = g * n_per
        for a in range(n_per):
            for b in range(n_per):
                if a != b:
                    src.append(base + a)
                    dst.append(base + b)
    edge_index = jnp.array([src, dst], dtype=jnp.int32)    # [2, E]
    E = edge_index.shape[1]
    # full_edge_attr[:, 0]: target graph-theoretic distances (positive)
    d = jax.random.uniform(k2, (E,), dtype=jnp.float32, minval=0.5, maxval=2.5)

    out = scaled_stress_pallas(node_pos, edge_index, d, node_batch, G)
    out = jax.block_until_ready(out)

    ref = ref_scaled_stress(node_pos, edge_index, d, node_batch, G)
    assert jnp.allclose(out, ref, rtol=1e-4, atol=1e-4), (out, ref)
    print("KERNEL_OK")
</pallas_src>

<mosaic_0001>
module attributes {stable_mosaic.version = 11 : i64} {
  func.func @_partials_kernel(%arg0: i32, %arg1: i32, %arg2: memref<6x128xf32, #tpu.memory_space<vmem>>, %arg3: memref<1x8x1xf32, #tpu.memory_space<vmem>>, %arg4: memref<1x8x1xf32, #tpu.memory_space<vmem>>, %arg5: memref<1x8x1xf32, #tpu.memory_space<vmem>>) attributes {dimension_semantics = [#tpu.dimension_semantics<parallel>, #tpu.dimension_semantics<arbitrary>], iteration_bounds = array<i64: 2, 1>, scalar_prefetch = 0 : i64, scratch_operands = 0 : i64, tpu.core_type = #tpu.core_type<tc>, window_params = [{transform_indices = @transform_0, window_bounds = array<i64: 6, 128>}, {transform_indices = @transform_1, window_bounds = array<i64: 1, 8, 1>}, {transform_indices = @transform_2, window_bounds = array<i64: 1, 8, 1>}, {transform_indices = @transform_3, window_bounds = array<i64: 1, 8, 1>}]} {
    %c0_i32 = arith.constant 0 : i32
    %0 = arith.cmpi eq, %arg1, %c0_i32 : i32
    %1 = arith.extui %0 : i1 to i32
    %c0_i32_0 = arith.constant 0 : i32
    %2 = arith.cmpi ne, %1, %c0_i32_0 : i32
    scf.if %2 {
      %cst_23 = arith.constant 0.000000e+00 : f32
      %49 = vector.broadcast %cst_23 : f32 to vector<8x1xf32>
      %c0_24 = arith.constant 0 : index
      %c0_25 = arith.constant 0 : index
      %c0_26 = arith.constant 0 : index
      %50 = vector.load %arg3[%c0_24, %c0_25, %c0_26] : memref<1x8x1xf32, #tpu.memory_space<vmem>>, vector<1x8x1xf32>
      %51 = vector.shape_cast %50 : vector<1x8x1xf32> to vector<8x1xf32>
      %52 = vector.shape_cast %49 : vector<8x1xf32> to vector<1x8x1xf32>
      tpu.vector_store %arg3[%c0_24, %c0_25, %c0_26], %52 {strides = array<i32>} : memref<1x8x1xf32, #tpu.memory_space<vmem>>, vector<1x8x1xf32>,
      %cst_27 = arith.constant 0.000000e+00 : f32
      %53 = vector.broadcast %cst_27 : f32 to vector<8x1xf32>
      %c0_28 = arith.constant 0 : index
      %c0_29 = arith.constant 0 : index
      %c0_30 = arith.constant 0 : index
      %54 = vector.load %arg4[%c0_28, %c0_29, %c0_30] : memref<1x8x1xf32, #tpu.memory_space<vmem>>, vector<1x8x1xf32>
      %55 = vector.shape_cast %54 : vector<1x8x1xf32> to vector<8x1xf32>
      %56 = vector.shape_cast %53 : vector<8x1xf32> to vector<1x8x1xf32>
      tpu.vector_store %arg4[%c0_28, %c0_29, %c0_30], %56 {strides = array<i32>} : memref<1x8x1xf32, #tpu.memory_space<vmem>>, vector<1x8x1xf32>,
      %cst_31 = arith.constant 0.000000e+00 : f32
      %57 = vector.broadcast %cst_31 : f32 to vector<8x1xf32>
      %c0_32 = arith.constant 0 : index
      %c0_33 = arith.constant 0 : index
      %c0_34 = arith.constant 0 : index
      %58 = vector.load %arg5[%c0_32, %c0_33, %c0_34] : memref<1x8x1xf32, #tpu.memory_space<vmem>>, vector<1x8x1xf32>
      %59 = vector.shape_cast %58 : vector<1x8x1xf32> to vector<8x1xf32>
      %60 = vector.shape_cast %57 : vector<8x1xf32> to vector<1x8x1xf32>
      tpu.vector_store %arg5[%c0_32, %c0_33, %c0_34], %60 {strides = array<i32>} : memref<1x8x1xf32, #tpu.memory_space<vmem>>, vector<1x8x1xf32>,
    } else {
    }
    %c0 = arith.constant 0 : index
    %c0_1 = arith.constant 0 : index
    %3 = vector.load %arg2[%c0, %c0_1] : memref<6x128xf32, #tpu.memory_space<vmem>>, vector<6x128xf32>
    %4 = vector.extract_strided_slice %3 {offsets = [0, 0], sizes = [2, 128], strides = [1, 1]} : vector<6x128xf32> to vector<2x128xf32>
    %5 = vector.extract_strided_slice %3 {offsets = [2, 0], sizes = [2, 128], strides = [1, 1]} : vector<6x128xf32> to vector<2x128xf32>
    %6 = vector.extract_strided_slice %3 {offsets = [4, 0], sizes = [1, 128], strides = [1, 1]} : vector<6x128xf32> to vector<1x128xf32>
    %7 = vector.extract_strided_slice %3 {offsets = [5, 0], sizes = [1, 128], strides = [1, 1]} : vector<6x128xf32> to vector<1x128xf32>
    %8 = arith.subf %4, %5 : vector<2x128xf32>
    %9 = arith.mulf %8, %8 : vector<2x128xf32>
    %cst = arith.constant dense<0.000000e+00> : vector<128xf32>
    %10 = vector.multi_reduction <add>, %9, %cst [0] : vector<2x128xf32> to vector<128xf32>
    %11 = vector.shape_cast %10 : vector<128xf32> to vector<1x128xf32>
    %12 = math.sqrt %11 : vector<1x128xf32>
    %13 = arith.divf %12, %6 : vector<1x128xf32>
    %14 = arith.mulf %13, %13 : vector<1x128xf32>
    %15 = arith.fptosi %7 : vector<1x128xf32> to vector<1x128xi32>
    %16 = tpu.iota {dimensions = array<i32: 0>} : vector<8x128xi32>
    %17 = vector.broadcast %15 : vector<1x128xi32> to vector<8x128xi32>
    %18 = arith.cmpi eq, %16, %17 : vector<8x128xi32>
    %19 = arith.extui %18 : vector<8x128xi1> to vector<8x128xi32>
    %20 = arith.sitofp %19 : vector<8x128xi32> to vector<8x128xf32>
    %c0_2 = arith.constant 0 : index
    %c0_3 = arith.constant 0 : index
    %c0_4 = arith.constant 0 : index
    %21 = vector.load %arg3[%c0_2, %c0_3, %c0_4] : memref<1x8x1xf32, #tpu.memory_space<vmem>>, vector<1x8x1xf32>
    %22 = vector.shape_cast %21 : vector<1x8x1xf32> to vector<8x1xf32>
    %23 = vector.broadcast %13 : vector<1x128xf32> to vector<8x128xf32>
    %24 = arith.mulf %20, %23 : vector<8x128xf32>
    %cst_5 = arith.constant dense<0.000000e+00> : vector<8xf32>
    %25 = vector.multi_reduction <add>, %24, %cst_5 [1] : vector<8x128xf32> to vector<8xf32>
    %26 = vector.shape_cast %25 : vector<8xf32> to vector<8x1xf32>
    %27 = arith.addf %22, %26 : vector<8x1xf32>
    %c0_6 = arith.constant 0 : index
    %c0_7 = arith.constant 0 : index
    %c0_8 = arith.constant 0 : index
    %28 = vector.load %arg3[%c0_6, %c0_7, %c0_8] : memref<1x8x1xf32, #tpu.memory_space<vmem>>, vector<1x8x1xf32>
    %29 = vector.shape_cast %28 : vector<1x8x1xf32> to vector<8x1xf32>
    %30 = vector.shape_cast %27 : vector<8x1xf32> to vector<1x8x1xf32>
    tpu.vector_store %arg3[%c0_6, %c0_7, %c0_8], %30 {strides = array<i32>} : memref<1x8x1xf32, #tpu.memory_space<vmem>>, vector<1x8x1xf32>,
    %c0_9 = arith.constant 0 : index
    %c0_10 = arith.constant 0 : index
    %c0_11 = arith.constant 0 : index
    %31 = vector.load %arg4[%c0_9, %c0_10, %c0_11] : memref<1x8x1xf32, #tpu.memory_space<vmem>>, vector<1x8x1xf32>
    %32 = vector.shape_cast %31 : vector<1x8x1xf32> to vector<8x1xf32>
    %33 = vector.broadcast %14 : vector<1x128xf32> to vector<8x128xf32>
    %34 = arith.mulf %20, %33 : vector<8x128xf32>
    %cst_12 = arith.constant dense<0.000000e+00> : vector<8xf32>
    %35 = vector.multi_reduction <add>, %34, %cst_12 [1] : vector<8x128xf32> to vector<8xf32>
    %36 = vector.shape_cast %35 : vector<8xf32> to vector<8x1xf32>
    %37 = arith.addf %32, %36 : vector<8x1xf32>
    %c0_13 = arith.constant 0 : index
    %c0_14 = arith.constant 0 : index
    %c0_15 = arith.constant 0 : index
    %38 = vector.load %arg4[%c0_13, %c0_14, %c0_15] : memref<1x8x1xf32, #tpu.memory_space<vmem>>, vector<1x8x1xf32>
    %39 = vector.shape_cast %38 : vector<1x8x1xf32> to vector<8x1xf32>
    %40 = vector.shape_cast %37 : vector<8x1xf32> to vector<1x8x1xf32>
    tpu.vector_store %arg4[%c0_13, %c0_14, %c0_15], %40 {strides = array<i32>} : memref<1x8x1xf32, #tpu.memory_space<vmem>>, vector<1x8x1xf32>,
    %c0_16 = arith.constant 0 : index
    %c0_17 = arith.constant 0 : index
    %c0_18 = arith.constant 0 : index
    %41 = vector.load %arg5[%c0_16, %c0_17, %c0_18] : memref<1x8x1xf32, #tpu.memory_space<vmem>>, vector<1x8x1xf32>
    %42 = vector.shape_cast %41 : vector<1x8x1xf32> to vector<8x1xf32>
    %cst_19 = arith.constant dense<0.000000e+00> : vector<8xf32>
    %43 = vector.multi_reduction <add>, %20, %cst_19 [1] : vector<8x128xf32> to vector<8xf32>
    %44 = vector.shape_cast %43 : vector<8xf32> to vector<8x1xf32>
    %45 = arith.addf %42, %44 : vector<8x1xf32>
    %c0_20 = arith.constant 0 : index
    %c0_21 = arith.constant 0 : index
    %c0_22 = arith.constant 0 : index
    %46 = vector.load %arg5[%c0_20, %c0_21, %c0_22] : memref<1x8x1xf32, #tpu.memory_space<vmem>>, vector<1x8x1xf32>
    %47 = vector.shape_cast %46 : vector<1x8x1xf32> to vector<8x1xf32>
    %48 = vector.shape_cast %45 : vector<8x1xf32> to vector<1x8x1xf32>
    tpu.vector_store %arg5[%c0_20, %c0_21, %c0_22], %48 {strides = array<i32>} : memref<1x8x1xf32, #tpu.memory_space<vmem>>, vector<1x8x1xf32>,
    return
  }
  func.func @transform_0(%arg0: i32, %arg1: i32) -> (i32, i32) {
    %c1_i32 = arith.constant 1 : i32
    %0 = arith.muli %arg0, %c1_i32 : i32
    %1 = arith.addi %0, %arg1 : i32
    %c0_i32 = arith.constant 0 : i32
    %c0_i32_0 = arith.constant 0 : i32
    return %c0_i32, %1 : i32, i32
  }
  func.func @transform_1(%arg0: i32, %arg1: i32) -> (i32, i32, i32) {
    %c0_i32 = arith.constant 0 : i32
    %c0_i32_0 = arith.constant 0 : i32
    %c0_i32_1 = arith.constant 0 : i32
    return %arg0, %c0_i32, %c0_i32_0 : i32, i32, i32
  }
  func.func @transform_2(%arg0: i32, %arg1: i32) -> (i32, i32, i32) {
    %c0_i32 = arith.constant 0 : i32
    %c0_i32_0 = arith.constant 0 : i32
    %c0_i32_1 = arith.constant 0 : i32
    return %arg0, %c0_i32, %c0_i32_0 : i32, i32, i32
  }
  func.func @transform_3(%arg0: i32, %arg1: i32) -> (i32, i32, i32) {
    %c0_i32 = arith.constant 0 : i32
    %c0_i32_0 = arith.constant 0 : i32
    %c0_i32_1 = arith.constant 0 : i32
    return %arg0, %c0_i32, %c0_i32_0 : i32, i32, i32
  }
}

</mosaic_0001>

<llo_original>
// kernel: tpu_custom_call.1
$region0: #{tpu_custom_call.1}
  #allocation0 [shape = 'u32[]', space=smem, size = 0x4, offset = 0x4, fixed_abs, tag = 'smem constant byte address 0x4 - core index']
  #allocation1 [shape = 'u32[72,128]{1,0:T(1,128)}', space=vmem, size = 0x9000, scoped, tag = 'internal scratch']
  %s0 = inlined_call_operand.hbm [shape: f32[6,256], index: 0, kind: input, shape index: {}]
  %s1 = inlined_call_operand.vmem [shape: f32[2,8,1], index: 1, kind: output, shape index: {0}]
  %s2 = inlined_call_operand.vmem [shape: f32[2,8,1], index: 2, kind: output, shape index: {1}]
  %s3 = inlined_call_operand.vmem [shape: f32[2,8,1], index: 3, kind: output, shape index: {2}]
  %4 = xla_tuple %s1, %s2, %s3
  %s5 = sld [smem:[#allocation0]]
  $region61: #{tpu_custom_call.1} parent=0
    _
  %s7 = ssub.s32 1, %s5
  %s8 = scalar_select 0, %s7, %s5
  $region1: #{tpu_custom_call.1} parent=0
    #allocation2 [shape = 'u8[8192]{0}', space=vmem, size = 0x2000, scoped, tag = 'input window, operand 0']
    #allocation3 [shape = 's32[2]{0}', space=sflag, size = 0x8, scoped, tag = 'scoped memory for tpu_custom_call.1']
    %9 = vsyncpa [#allocation3], 0
    %s10 = scalar_lea.sflag [#allocation3], 1
    %11 = vsyncpa %s10, 0
    loop: start=0, step=1, limit=4
    $region2: #{tpu_custom_call.1} parent=1 // loop_pre_header
      _
    $region3: #{tpu_custom_call.1} parent=1 // loop_header
      %s13 = sphi 0, %s17
      %p14 = scmp.ge.s32.totalorder %s13, 4
      %s20 = sphi 0, %s32
      %s21 = sphi 0, %s28
      %s22 = sphi 0, %s20
      %s23 = sphi 0, %s21
      %s24 = sphi 0, %s22
      %s25 = sphi 0, %s23
      %s37 = sphi 0, %s39
      %s40 = sphi 0, %s37
      %s41 = sphi 0, %s40
      %s57 = sphi 0, %s41
      %s63 = sphi 0, %s65
      %s66 = sphi 0, %s63
      %s67 = sphi 0, %s66
      %s83 = sphi 0, %s67
      %s89 = sphi 0, %s91
      %s92 = sphi 0, %s89
      %s93 = sphi 0, %s92
      %s109 = sphi 0, %s93
      %s115 = sphi 0, %s117
      %s118 = sphi 0, %s115
      %s119 = sphi 0, %s118
      %s135 = sphi 0, %s119
    $region4: #{tpu_custom_call.1} parent=1 // loop_header_branch
      %16 = sbr.rel (%p14) target = $region8
    $region5: #{tpu_custom_call.1} parent=1 // loop_body
      %s18 = ssub.s32 %s13, 1
      %s19 = ssub.s32 %s13, 2
      %s26 = sadd.s32 1, %s21
      %p27 = scmp.ge.s32.totalorder %s26, 1
      %s28 = scalar_select %p27, 0, %s26
      %s29 = sadd.s32 1, %s20
      %s30 = scalar_select %p27, %s29, %s20
      %p31 = scmp.ge.s32.totalorder %s30, 2
      %s32 = scalar_select %p31, 0, %s30
      %s33 = sadd.s32 %s20, %s21
      %s34 = sadd.s32 %s32, %s28
      %s35 = ssub.s32 %s33, %s34
      %p36 = scmp.eq.s32.totalorder %s35, 0
      %s38 = sadd.s32 %s37, 1
      %s39 = scalar_select %p36, %s37, %s38
      %p42 = pneg %p36
      %p43 = scmp.eq.s32.totalorder %s13, 1
      %p44 = por %p42, %p43
      %p45 = scmp.ne.s32.totalorder %s37, %s40
      %p46 = scmp.eq.s32.totalorder %s13, 0
      %p47 = por %p45, %p46
      %p48 = scmp.ne.s32.totalorder %s37, %s40
      %p49 = scmp.eq.s32.totalorder %s18, 1
      %p50 = por %p48, %p49
      %p51 = scmp.ne.s32.totalorder %s40, %s41
      %p52 = scmp.eq.s32.totalorder %s18, 0
      %p53 = por %p51, %p52
      %p54 = scmp.ne.s32.totalorder %s40, %s41
      %p55 = scmp.eq.s32.totalorder %s19, 1
      %p56 = por %p54, %p55
      %p58 = scmp.ne.s32.totalorder %s41, %s57
      %p59 = scmp.eq.s32.totalorder %s19, 0
      %p60 = por %p58, %p59
      %s61 = ssub.s32 %s20, %s32
      %p62 = scmp.eq.s32.totalorder %s61, 0
      %s64 = sadd.s32 %s63, 1
      %s65 = scalar_select %p62, %s63, %s64
      %p68 = pneg %p62
      %p69 = scmp.eq.s32.totalorder %s13, 1
      %p70 = por %p68, %p69
      %p71 = scmp.ne.s32.totalorder %s63, %s66
      %p72 = scmp.eq.s32.totalorder %s13, 0
      %p73 = por %p71, %p72
      %p74 = scmp.ne.s32.totalorder %s63, %s66
      %p75 = scmp.eq.s32.totalorder %s18, 1
      %p76 = por %p74, %p75
      %p77 = scmp.ne.s32.totalorder %s66, %s67
      %p78 = scmp.eq.s32.totalorder %s18, 0
      %p79 = por %p77, %p78
      %p80 = scmp.ne.s32.totalorder %s66, %s67
      %p81 = scmp.eq.s32.totalorder %s19, 1
      %p82 = por %p80, %p81
      %p84 = scmp.ne.s32.totalorder %s67, %s83
      %p85 = scmp.eq.s32.totalorder %s19, 0
      %p86 = por %p84, %p85
      %s87 = ssub.s32 %s20, %s32
      %p88 = scmp.eq.s32.totalorder %s87, 0
      %s90 = sadd.s32 %s89, 1
      %s91 = scalar_select %p88, %s89, %s90
      %p94 = pneg %p88
      %p95 = scmp.eq.s32.totalorder %s13, 1
      %p96 = por %p94, %p95
      %p97 = scmp.ne.s32.totalorder %s89, %s92
      %p98 = scmp.eq.s32.totalorder %s13, 0
      %p99 = por %p97, %p98
      %p100 = scmp.ne.s32.totalorder %s89, %s92
      %p101 = scmp.eq.s32.totalorder %s18, 1
      %p102 = por %p100, %p101
      %p103 = scmp.ne.s32.totalorder %s92, %s93
      %p104 = scmp.eq.s32.totalorder %s18, 0
      %p105 = por %p103, %p104
      %p106 = scmp.ne.s32.totalorder %s92, %s93
      %p107 = scmp.eq.s32.totalorder %s19, 1
      %p108 = por %p106, %p107
      %p110 = scmp.ne.s32.totalorder %s93, %s109
      %p111 = scmp.eq.s32.totalorder %s19, 0
      %p112 = por %p110, %p111
      %s113 = ssub.s32 %s20, %s32
      %p114 = scmp.eq.s32.totalorder %s113, 0
      %s116 = sadd.s32 %s115, 1
      %s117 = scalar_select %p114, %s115, %s116
      %p120 = pneg %p114
      %p121 = scmp.eq.s32.totalorder %s13, 1
      %p122 = por %p120, %p121
      %p123 = scmp.ne.s32.totalorder %s115, %s118
      %p124 = scmp.eq.s32.totalorder %s13, 0
      %p125 = por %p123, %p124
      %p126 = scmp.ne.s32.totalorder %s115, %s118
      %p127 = scmp.eq.s32.totalorder %s18, 1
      %p128 = por %p126, %p127
      %p129 = scmp.ne.s32.totalorder %s118, %s119
      %p130 = scmp.eq.s32.totalorder %s18, 0
      %p131 = por %p129, %p130
      %p132 = scmp.ne.s32.totalorder %s118, %s119
      %p133 = scmp.eq.s32.totalorder %s19, 1
      %p134 = por %p132, %p133
      %p136 = scmp.ne.s32.totalorder %s119, %s135
      %p137 = scmp.eq.s32.totalorder %s19, 0
      %p138 = por %p136, %p137
      %p139 = scmp.le.s32.totalorder 1, %s13
      %p140 = scmp.lt.s32.totalorder %s13, 3
      %p141 = pnand %p139, %p140
      %p142 = pneg %p141
      // Predicated region
      $region9: #{tpu_custom_call.1} parent=5 // pred_check
        _
      $region10: #{tpu_custom_call.1} parent=5 // pred_check_branch
        %144 = sbr.rel (%p141) target = $region12
      $region11: #{tpu_custom_call.1} parent=5 // pred_region
        %s145 = ssub.s32 %s13, 1
      $region12: #{tpu_custom_call.1} parent=5 // pred_fallthru
        _
      %p146 = scmp.lt.s32.totalorder %s13, 2
      // Predicated region
      $region13: #{tpu_custom_call.1} parent=5 // pred_check
        %p147 = pneg %p146
      $region14: #{tpu_custom_call.1} parent=5 // pred_check_branch
        %149 = sbr.rel (%p147) target = $region16
      $region15: #{tpu_custom_call.1} parent=5 // pred_region
        // Predicated region
        $region17: #{tpu_custom_call.1} parent=15 // pred_check
          %p150 = pneg %p47
        $region18: #{tpu_custom_call.1} parent=15 // pred_check_branch
          %152 = sbr.rel (%p150) target = $region20
        $region19: #{tpu_custom_call.1} parent=15 // pred_region
          %s153 = sand.u32 %s37, 1
          %s154 = scalar_lea.sflag [#allocation3], %s153
          %s155 = sand.u32 %s37, 1
          %s156 = smul.addr %s155, 8
          %s157 = scalar_lea.vmem [#allocation2], %s156
          %s158 = sadd.s32 %s20, %s21
          %160 = vsyncadd %s154, 0
          %s161 = smul.addr %s158, 8
          %s162 = scalar_lea.hbm %s0, %s161
          %s164 = sshll.u32 %s162, 4
          %s165 = int_to_ptr.hbm [resolvable:$true] %s164
          %s166 = sshll.u32 %s157, 4
          %s167 = int_to_ptr.vmem [resolvable:$true] %s166
          %169 = dma.hbm_to_vmem [thread:$0]  %s165, 128, %s167, %s154
        $region20: #{tpu_custom_call.1} parent=15 // pred_fallthru
          _
      $region16: #{tpu_custom_call.1} parent=5 // pred_fallthru
        _
      %p170 = scmp.le.s32.totalorder 1, %s13
      %p171 = scmp.lt.s32.totalorder %s13, 3
      %p172 = pnand %p170, %p171
      %p173 = pneg %p172
      // Predicated region
      $region21: #{tpu_custom_call.1} parent=5 // pred_check
        _
      $region22: #{tpu_custom_call.1} parent=5 // pred_check_branch
        %175 = sbr.rel (%p172) target = $region24
      $region23: #{tpu_custom_call.1} parent=5 // pred_region
        %s176 = ssub.s32 %s13, 1
        %s177 = sand.u32 %s40, 1
        %s178 = scalar_lea.sflag [#allocation3], %s177
        %s179 = sand.u32 %s40, 1
        %s180 = smul.addr %s179, 8
        %s181 = scalar_lea.vmem [#allocation2], %s180
        // Predicated region
        $region25: #{tpu_custom_call.1} parent=23 // pred_check
          %p182 = pneg %p53
        $region26: #{tpu_custom_call.1} parent=23 // pred_check_branch
          %184 = sbr.rel (%p182) target = $region28
        $region27: #{tpu_custom_call.1} parent=23 // pred_region
          %186 = dma.done %s178, 128
        $region28: #{tpu_custom_call.1} parent=23 // pred_fallthru
          _
        %s187 = sand.u32 %s40, 1
        %s188 = scalar_lea.sflag [#allocation3], %s187
        %s189 = sand.u32 %s40, 1
        %s190 = smul.addr %s189, 8
        %s191 = scalar_lea.vmem [#allocation2], %s190
        %p192 = pneg %p53
        %p193 = pneg %p50
        %p194 = pneg %p79
        %p195 = pneg %p76
        %p196 = scmp.lt.s32.totalorder %s22, 1
        %s197 = scalar_select %p196, %s22, 1
        %s198 = smul.addr %s197, 8
        %s199 = scalar_lea.vmem %s1, %s198
        %p200 = pneg %p105
        %p201 = pneg %p102
        %p202 = scmp.lt.s32.totalorder %s22, 1
        %s203 = scalar_select %p202, %s22, 1
        %s204 = smul.addr %s203, 8
        %s205 = scalar_lea.vmem %s2, %s204
        %p206 = pneg %p131
        %p207 = pneg %p128
        %p208 = scmp.lt.s32.totalorder %s22, 1
        %s209 = scalar_select %p208, %s22, 1
        %s210 = smul.addr %s209, 8
        %s211 = scalar_lea.vmem %s3, %s210
        %s212 = sadd.s32 %s22, %s23
        %p213 = scmp.lt.s32.totalorder %s22, 1
        %s214 = scalar_select %p213, %s22, 1
        %s215 = smul.addr %s214, 8
        %s216 = scalar_lea.vmem %s1, %s215
        %p217 = scmp.lt.s32.totalorder %s22, 1
        %s218 = scalar_select %p217, %s22, 1
        %s219 = smul.addr %s218, 8
        %s220 = scalar_lea.vmem %s2, %s219
        %p221 = scmp.lt.s32.totalorder %s22, 1
        %s222 = scalar_select %p221, %s22, 1
        %s223 = smul.addr %s222, 8
        %s224 = scalar_lea.vmem %s3, %s223
        %p225 = scmp.eq.s32.totalorder %s23, 0
        // Predicated region
        $region29: #{tpu_custom_call.1} parent=23 // pred_check
          %p226 = pneg %p225
        $region30: #{tpu_custom_call.1} parent=23 // pred_check_branch
          %228 = sbr.rel (%p226) target = $region32
        $region31: #{tpu_custom_call.1} parent=23 // pred_region
          %vm229 = vcmask 7168
          %230 = vst.msk [vmem:[%s216] sm:$0xff] %vm229, 0.0
          %231 = vst.msk [vmem:[%s220] sm:$0xff] %vm229, 0.0
          %232 = vst.msk [vmem:[%s224] sm:$0xff] %vm229, 0.0
        $region32: #{tpu_custom_call.1} parent=23 // pred_fallthru
          _
        %v233 = vld [vmem:[%s181] sm:$0x3f]
        %v235 = vrot.slane %v233, 2
        %v237 = vsub.f32 %v233, %v235
        %v238 = vmul.f32 %v237, %v237
        %vm239 = vcmask 1041408
        %v240 = vsel %vm239, %v238, 0.0
        %v241 = vrot.slane %v240, 4
        %v242 = vadd.f32 %v240, %v241
        %v243 = vrot.slane %v242, 2
        %v244 = vadd.f32 %v242, %v243
        %v245 = vrot.slane %v244, 1
        %v246 = vadd.f32 %v244, %v245
        %v247 = vrsqrt.pop %v246
        %v248 = vmul.f32 %v247, %v246
        %v249 = vmul.f32 %v248, %v247
        %v250 = vmul.f32 0.5, %v249
        %v251 = vsub.f32 1.5, %v250
        %v252 = vmul.f32 %v247, %v251
        %v253 = vmul.f32 %v246, %v252
        %vm254 = vcmp.eq.f32.partialorder %v246, inf
        %v255 = vsel %vm254, %v246, %v253
        %vm256 = vcmp.eq.f32.partialorder %v246, 0.0
        %v257 = vand.u32 %v246, 2147483648
        %v258 = vsel %vm256, %v257, %v255
        %v259 = vrcp.pop %v233
        %v260 = vmul.f32 %v233, %v259
        %v261 = vsub.f32 1.0, %v260
        %v262 = vmul.f32 %v259, %v261
        %v263 = vadd.f32 %v259, %v262
        %vm264 = vweird.f32 %v233
        %vm265 = vweird.f32 %v259
        %vm266 = vmor %vm264, %vm265
        %v267 = vsel %vm266, %v259, %v263
        %v268 = vand.u32 2147483647, %v233
        %vm269 = vcmp.eq.f32.partialorder %v268, 8.507059e+37
        %v270 = vand.u32 %v233, 2147483648
        %v271 = vor.u32 1.1754944e-38, %v270
        %v272 = vsel %vm269, %v271, %v267
        %v273 = vmul.f32 %v258, %v272
        %v274 = vmul.f32 %v273, %v273
        %v275 = vcvt.f32.s32.to.zero.pseudo %v233
        %v276 = vlaneseq
        %v277 = vshrl.u32 %v276, 7
        %v278 = vperm.slane %v275, 5
        %vm279 = vcmp.eq.s32.totalorder %v277, %v278
        %v280 = vsel %vm279, 1, 0
        %v281 = vcvt.s32.f32 %v280
        %v282 = vld [vmem:[%s216] sm:$0xff]
        %v283 = vperm.slane %v273, 4
        %v284 = vmul.f32 %v281, %v283
        %285 = vadd.xlane.f32.xlu0 %v284
        %v286 = vpop.xlane.xlu0 %285
        %v287 = vadd.f32 %v282, %v286
        %vm288 = vcmask 7168
        %289 = vst.msk [vmem:[%s216] sm:$0xff] %vm288, %v287
        %v290 = vld [vmem:[%s220] sm:$0xff]
        %v291 = vperm.slane %v274, 4
        %v292 = vmul.f32 %v281, %v291
        %293 = vadd.xlane.f32.xlu0 %v292
        %v294 = vpop.xlane.xlu0 %293
        %v295 = vadd.f32 %v290, %v294
        %296 = vst.msk [vmem:[%s220] sm:$0xff] %vm288, %v295
        %v297 = vld [vmem:[%s224] sm:$0xff]
        %298 = vadd.xlane.f32.xlu0 %v281
        %v299 = vpop.xlane.xlu0 %298
        %v300 = vadd.f32 %v297, %v299
        %301 = vst.msk [vmem:[%s224] sm:$0xff] %vm288, %v300
        %p302 = scmp.lt.s32.totalorder %s22, 1
        %s303 = scalar_select %p302, %s22, 1
        %s304 = smul.addr %s303, 8
        %s305 = scalar_lea.vmem %s1, %s304
        %p306 = scmp.lt.s32.totalorder %s22, 1
        %s307 = scalar_select %p306, %s22, 1
        %s308 = smul.addr %s307, 8
        %s309 = scalar_lea.vmem %s2, %s308
        %p310 = scmp.lt.s32.totalorder %s22, 1
        %s311 = scalar_select %p310, %s22, 1
        %s312 = smul.addr %s311, 8
        %s313 = scalar_lea.vmem %s3, %s312
        // Predicated region
        $region33: #{tpu_custom_call.1} parent=23 // pred_check
          %p314 = pneg %p76
        $region34: #{tpu_custom_call.1} parent=23 // pred_check_branch
          %316 = sbr.rel (%p314) target = $region36
        $region35: #{tpu_custom_call.1} parent=23 // pred_region
          _
        $region36: #{tpu_custom_call.1} parent=23 // pred_fallthru
          _
        // Predicated region
        $region37: #{tpu_custom_call.1} parent=23 // pred_check
          %p317 = pneg %p102
        $region38: #{tpu_custom_call.1} parent=23 // pred_check_branch
          %319 = sbr.rel (%p317) target = $region40
        $region39: #{tpu_custom_call.1} parent=23 // pred_region
          _
        $region40: #{tpu_custom_call.1} parent=23 // pred_fallthru
          _
        // Predicated region
        $region41: #{tpu_custom_call.1} parent=23 // pred_check
          %p320 = pneg %p128
        $region42: #{tpu_custom_call.1} parent=23 // pred_check_branch
          %322 = sbr.rel (%p320) target = $region44
        $region43: #{tpu_custom_call.1} parent=23 // pred_region
          _
        $region44: #{tpu_custom_call.1} parent=23 // pred_fallthru
          _
      $region24: #{tpu_custom_call.1} parent=5 // pred_fallthru
        _
      %p323 = scmp.le.s32.totalorder 2, %s13
      // Predicated region
      $region45: #{tpu_custom_call.1} parent=5 // pred_check
        %p324 = pneg %p323
      $region46: #{tpu_custom_call.1} parent=5 // pred_check_branch
        %326 = sbr.rel (%p324) target = $region48
      $region47: #{tpu_custom_call.1} parent=5 // pred_region
        %s327 = ssub.s32 %s13, 2
        // Predicated region
        $region49: #{tpu_custom_call.1} parent=47 // pred_check
          %p328 = pneg %p82
        $region50: #{tpu_custom_call.1} parent=47 // pred_check_branch
          %330 = sbr.rel (%p328) target = $region52
        $region51: #{tpu_custom_call.1} parent=47 // pred_region
          %p331 = scmp.lt.s32.totalorder %s24, 1
          %s332 = scalar_select %p331, %s24, 1
          %s333 = smul.addr %s332, 8
          %s334 = scalar_lea.vmem %s1, %s333
        $region52: #{tpu_custom_call.1} parent=47 // pred_fallthru
          _
        // Predicated region
        $region53: #{tpu_custom_call.1} parent=47 // pred_check
          %p335 = pneg %p108
        $region54: #{tpu_custom_call.1} parent=47 // pred_check_branch
          %337 = sbr.rel (%p335) target = $region56
        $region55: #{tpu_custom_call.1} parent=47 // pred_region
          %p338 = scmp.lt.s32.totalorder %s24, 1
          %s339 = scalar_select %p338, %s24, 1
          %s340 = smul.addr %s339, 8
          %s341 = scalar_lea.vmem %s2, %s340
        $region56: #{tpu_custom_call.1} parent=47 // pred_fallthru
          _
        // Predicated region
        $region57: #{tpu_custom_call.1} parent=47 // pred_check
          %p342 = pneg %p134
        $region58: #{tpu_custom_call.1} parent=47 // pred_check_branch
          %344 = sbr.rel (%p342) target = $region60
        $region59: #{tpu_custom_call.1} parent=47 // pred_region
          %p345 = scmp.lt.s32.totalorder %s24, 1
          %s346 = scalar_select %p345, %s24, 1
          %s347 = smul.addr %s346, 8
          %s348 = scalar_lea.vmem %s3, %s347
        $region60: #{tpu_custom_call.1} parent=47 // pred_fallthru
          _
      $region48: #{tpu_custom_call.1} parent=5 // pred_fallthru
        _
    $region6: #{tpu_custom_call.1} parent=1 // loop_footer
      %s17 = sadd.s32 1, %s13
    $region7: #{tpu_custom_call.1} parent=1 // loop_footer_branch
      %12 = sbr.rel target = $region3
    $region8: #{tpu_custom_call.1} parent=1 // loop_exit
      _
    %349 = vsyncpa [#allocation3], 1
    %s350 = scalar_lea.sflag [#allocation3], 1
    %351 = vsyncpa %s350, 1

</llo_original>
